<compile_context>
chip_gen: v7x
topology: tpu7x:2x2x1
jax: 0.10.0
libtpu: 0.0.40
codegen_flags: <defaults>
</compile_context>

<pallas_src>
import functools

import jax
import jax.numpy as jnp
from jax.experimental import pallas as pl
from jax.experimental.pallas import tpu as pltpu

OC = 16            # deconv output channels (fixed by the module)
OUT_RAW = OC * 4   # 64  = 16 * 2 * 2  (flattened NCHW output per row)
OUT_PAD = 128      # lane-dense padded output width
MAX_TB = 512       # max batch-tile rows per grid step


def ae_decoder_kernel(z_ref, w1_ref, b1_ref, w2_ref, b2_ref, out_ref):
    # z: (TB, L) [f32 or bf16], w1: (L, M), b1: (1, M) f32,
    # w2: (M, OUT_PAD), b2: (1, OUT_PAD) f32, out: (TB, OUT_PAD) f32.
    h = jnp.dot(z_ref[...], w1_ref[...], preferred_element_type=jnp.float32)
    h = jnp.maximum(h + b1_ref[...], 0.0)                       # bias + ReLU in f32 (VPU)
    y = jnp.dot(h.astype(w2_ref.dtype), w2_ref[...],
                preferred_element_type=jnp.float32) + b2_ref[...]
    out_ref[...] = jax.nn.sigmoid(y)                            # sigmoid in f32 (EUP)


def prepare_decoder_params(fc1_w, fc1_b, deconv_w, deconv_b,
                           compute_dtype=jnp.float32):
    """One-time parameter plumbing (call at model init / param load, NOT per forward).

    fc1_w: (M, L), fc1_b: (M,), deconv_w: (M, 16, 3, 3), deconv_b: (16,).
    """
    m = fc1_w.shape[0]
    w1 = jnp.asarray(fc1_w.T, compute_dtype)                    # (L, M)
    b1 = jnp.asarray(fc1_b, jnp.float32).reshape(1, m)          # (1, M) f32
    # Only kernel taps (kh, kw) in {1, 2} land inside the 2x2 output window.
    w2 = deconv_w[:, :, 1:, 1:].reshape(m, OUT_RAW)             # (M, 64)
    w2 = jnp.pad(w2, ((0, 0), (0, OUT_PAD - OUT_RAW))).astype(compute_dtype)
    b2 = jnp.repeat(jnp.asarray(deconv_b, jnp.float32), 4)      # per (oh, ow)
    b2 = jnp.pad(b2, (0, OUT_PAD - OUT_RAW)).reshape(1, OUT_PAD)
    return w1, b1, w2, b2


@functools.partial(jax.jit, static_argnames=())
def ae_decoder_forward(z, w1, b1, w2, b2):
    """z: (B, latent).  Returns (B, 16, 2, 2) NCHW, f32 in [0, 1]."""
    B, L = z.shape
    M = w1.shape[1]

    # Batch tiling: single tile for small B, 512-row pipelined tiles for large B.
    TB = B if B <= MAX_TB else MAX_TB
    Bp = pl.cdiv(B, TB) * TB
    zp = z.astype(w1.dtype)
    if Bp != B:
        zp = jnp.pad(zp, ((0, Bp - B), (0, 0)))
    nb = Bp // TB

    out_flat = pl.pallas_call(
        ae_decoder_kernel,
        out_shape=jax.ShapeDtypeStruct((Bp, OUT_PAD), jnp.float32),
        grid=(nb,),
        in_specs=[
            pl.BlockSpec((TB, L), lambda i: (i, 0)),        # z: tiled over batch
            pl.BlockSpec((L, M), lambda i: (0, 0)),         # weights stay VMEM-resident
            pl.BlockSpec((1, M), lambda i: (0, 0)),
            pl.BlockSpec((M, OUT_PAD), lambda i: (0, 0)),
            pl.BlockSpec((1, OUT_PAD), lambda i: (0, 0)),
        ],
        out_specs=pl.BlockSpec((TB, OUT_PAD), lambda i: (i, 0)),
        compiler_params=pltpu.CompilerParams(
            dimension_semantics=("parallel",),              # v7x: shard batch tiles over 2 TCs
        ),
    )(zp, w1, b1, w2, b2)

    # Drop lane padding + batch padding, reshape to NCHW.
    return out_flat[:B, :OUT_RAW].reshape(B, OC, 2, 2)


if __name__ == "__main__":
    # Small shapes consistent with the module: latent_size=32, m=64, batch=8.
    latent_size = 32
    m = 64
    B = 8

    key = jax.random.PRNGKey(0)
    k1, k2, k3, k4, k5 = jax.random.split(key, 5)

    # Deterministic synthetic parameters (PyTorch shapes).
    fc1_w = jax.random.normal(k1, (m, latent_size), jnp.float32) * 0.1
    fc1_b = jax.random.normal(k2, (m,), jnp.float32) * 0.1
    deconv_w = jax.random.normal(k3, (m, OC, 3, 3), jnp.float32) * 0.1   # (in, out, kh, kw)
    deconv_b = jax.random.normal(k4, (OC,), jnp.float32) * 0.1

    z = jax.random.normal(k5, (B, latent_size), jnp.float32)

    # One-time parameter prep (hoisted out of the forward path).
    # For v6e/v7x large-batch serving, pass compute_dtype=jnp.bfloat16 here.
    params = prepare_decoder_params(fc1_w, fc1_b, deconv_w, deconv_b,
                                    compute_dtype=jnp.float32)

    out = ae_decoder_forward(z, *params)
    out = jax.block_until_ready(out)

    # Pure-JAX reference (same algebraic collapse, un-padded).
    h_ref = jnp.maximum(z @ fc1_w.T + fc1_b, 0.0)
    y_ref = h_ref @ deconv_w[:, :, 1:, 1:].reshape(m, OUT_RAW) + jnp.repeat(deconv_b, 4)
    ref = jax.nn.sigmoid(y_ref).reshape(B, OC, 2, 2)

    assert out.shape == (B, OC, 2, 2), out.shape
    assert out.dtype == jnp.float32
    assert bool(jnp.all((out >= 0.0) & (out <= 1.0)))
    assert bool(jnp.allclose(out, ref, atol=1e-5, rtol=1e-5))
    print("KERNEL_OK")
</pallas_src>

<mosaic_0001>
module attributes {stable_mosaic.version = 11 : i64} {
  func.func @ae_decoder_kernel(%arg0: i32, %arg1: memref<8x32xf32, #tpu.memory_space<vmem>>, %arg2: memref<32x64xf32, #tpu.memory_space<vmem>>, %arg3: memref<1x64xf32, #tpu.memory_space<vmem>>, %arg4: memref<64x128xf32, #tpu.memory_space<vmem>>, %arg5: memref<1x128xf32, #tpu.memory_space<vmem>>, %arg6: memref<8x128xf32, #tpu.memory_space<vmem>>) attributes {dimension_semantics = [#tpu.dimension_semantics<parallel>], iteration_bounds = array<i64: 1>, scalar_prefetch = 0 : i64, scratch_operands = 0 : i64, tpu.core_type = #tpu.core_type<tc>, window_params = [{transform_indices = @transform_0, window_bounds = array<i64: 8, 32>}, {pipeline_mode = #tpu.pipeline_mode<synchronous>, transform_indices = @transform_1, window_bounds = array<i64: 32, 64>}, {pipeline_mode = #tpu.pipeline_mode<synchronous>, transform_indices = @transform_2, window_bounds = array<i64: 1, 64>}, {pipeline_mode = #tpu.pipeline_mode<synchronous>, transform_indices = @transform_3, window_bounds = array<i64: 64, 128>}, {pipeline_mode = #tpu.pipeline_mode<synchronous>, transform_indices = @transform_4, window_bounds = array<i64: 1, 128>}, {transform_indices = @transform_5, window_bounds = array<i64: 8, 128>}]} {
    %c0 = arith.constant 0 : index
    %c0_0 = arith.constant 0 : index
    %0 = vector.load %arg1[%c0, %c0_0] : memref<8x32xf32, #tpu.memory_space<vmem>>, vector<8x32xf32>
    %c0_1 = arith.constant 0 : index
    %c0_2 = arith.constant 0 : index
    %1 = vector.load %arg2[%c0_1, %c0_2] : memref<32x64xf32, #tpu.memory_space<vmem>>, vector<32x64xf32>
    %cst = arith.constant dense<0.000000e+00> : vector<8x64xf32>
    %2 = tpu.matmul %0, %1, %cst {dimension_numbers = #tpu.dot_dimension_numbers<[1], [0], [0], [1], [0, 0, 1, 1], [], []>} : vector<8x32xf32>, vector<32x64xf32>, vector<8x64xf32> -> vector<8x64xf32>
    %c0_3 = arith.constant 0 : index
    %c0_4 = arith.constant 0 : index
    %3 = vector.load %arg3[%c0_3, %c0_4] : memref<1x64xf32, #tpu.memory_space<vmem>>, vector<1x64xf32>
    %4 = vector.broadcast %3 : vector<1x64xf32> to vector<8x64xf32>
    %5 = arith.addf %2, %4 : vector<8x64xf32>
    %cst_5 = arith.constant 0.000000e+00 : f32
    %6 = vector.broadcast %cst_5 : f32 to vector<8x64xf32>
    %7 = arith.maximumf %5, %6 : vector<8x64xf32>
    %c0_6 = arith.constant 0 : index
    %c0_7 = arith.constant 0 : index
    %8 = vector.load %arg4[%c0_6, %c0_7] : memref<64x128xf32, #tpu.memory_space<vmem>>, vector<64x128xf32>
    %cst_8 = arith.constant dense<0.000000e+00> : vector<8x128xf32>
    %9 = tpu.matmul %7, %8, %cst_8 {dimension_numbers = #tpu.dot_dimension_numbers<[1], [0], [0], [1], [0, 0, 1, 1], [], []>} : vector<8x64xf32>, vector<64x128xf32>, vector<8x128xf32> -> vector<8x128xf32>
    %c0_9 = arith.constant 0 : index
    %c0_10 = arith.constant 0 : index
    %10 = vector.load %arg5[%c0_9, %c0_10] : memref<1x128xf32, #tpu.memory_space<vmem>>, vector<1x128xf32>
    %11 = vector.broadcast %10 : vector<1x128xf32> to vector<8x128xf32>
    %12 = arith.addf %9, %11 : vector<8x128xf32>
    %13 = arith.negf %12 : vector<8x128xf32>
    %14 = math.exp %13 : vector<8x128xf32>
    %cst_11 = arith.constant 1.000000e+00 : f32
    %15 = vector.broadcast %cst_11 : f32 to vector<8x128xf32>
    %16 = arith.addf %15, %14 : vector<8x128xf32>
    %17 = arith.divf %15, %16 : vector<8x128xf32>
    %c0_12 = arith.constant 0 : index
    %c0_13 = arith.constant 0 : index
    %18 = vector.load %arg6[%c0_12, %c0_13] : memref<8x128xf32, #tpu.memory_space<vmem>>, vector<8x128xf32>
    tpu.vector_store %arg6[%c0_12, %c0_13], %17 {strides = array<i32>} : memref<8x128xf32, #tpu.memory_space<vmem>>, vector<8x128xf32>,
    return
  }
  func.func @transform_0(%arg0: i32) -> (i32, i32) {
    %c0_i32 = arith.constant 0 : i32
    %c0_i32_0 = arith.constant 0 : i32
    return %arg0, %c0_i32 : i32, i32
  }
  func.func @transform_1(%arg0: i32) -> (i32, i32) {
    %c0_i32 = arith.constant 0 : i32
    %c0_i32_0 = arith.constant 0 : i32
    %c0_i32_1 = arith.constant 0 : i32
    return %c0_i32, %c0_i32_0 : i32, i32
  }
  func.func @transform_2(%arg0: i32) -> (i32, i32) {
    %c0_i32 = arith.constant 0 : i32
    %c0_i32_0 = arith.constant 0 : i32
    %c0_i32_1 = arith.constant 0 : i32
    return %c0_i32, %c0_i32_0 : i32, i32
  }
  func.func @transform_3(%arg0: i32) -> (i32, i32) {
    %c0_i32 = arith.constant 0 : i32
    %c0_i32_0 = arith.constant 0 : i32
    %c0_i32_1 = arith.constant 0 : i32
    return %c0_i32, %c0_i32_0 : i32, i32
  }
  func.func @transform_4(%arg0: i32) -> (i32, i32) {
    %c0_i32 = arith.constant 0 : i32
    %c0_i32_0 = arith.constant 0 : i32
    %c0_i32_1 = arith.constant 0 : i32
    return %c0_i32, %c0_i32_0 : i32, i32
  }
  func.func @transform_5(%arg0: i32) -> (i32, i32) {
    %c0_i32 = arith.constant 0 : i32
    %c0_i32_0 = arith.constant 0 : i32
    return %arg0, %c0_i32 : i32, i32
  }
}

</mosaic_0001>

<llo_original>
// kernel: ae_decoder_forward.1
$region0: #{ae_decoder_forward.1}
  #allocation0 [shape = 'u32[]', space=smem, size = 0x4, offset = 0x4, fixed_abs, tag = 'smem constant byte address 0x4 - core index']
  #allocation1 [shape = 'u32[144,128]{1,0:T(1,128)}', space=vmem, size = 0x12000, scoped, tag = 'internal scratch']
  %s0 = inlined_call_operand.hbm [shape: f32[8,32], index: 0, kind: input, shape index: {}]
  %s1 = inlined_call_operand.hbm [shape: f32[32,64], index: 1, kind: input, shape index: {}]
  %s2 = inlined_call_operand.vmem [shape: f32[1,64], index: 2, kind: input, shape index: {}]
  %s3 = inlined_call_operand.hbm [shape: f32[64,128], index: 3, kind: input, shape index: {}]
  %s4 = inlined_call_operand.vmem [shape: f32[1,128], index: 4, kind: input, shape index: {}]
  %s5 = inlined_call_operand.vmem [shape: f32[8,128], index: 5, kind: output, shape index: {}]
  %s6 = sld [smem:[#allocation0]]
  $region42: #{ae_decoder_forward.1} parent=0
    _
  %s8 = ssub.s32 1, %s6
  %s9 = scalar_select 0, %s8, %s6
  $region1: #{ae_decoder_forward.1} parent=0
    #allocation2 [shape = 'u8[4096]{0}', space=vmem, size = 0x1000, scoped, tag = 'input window, operand 0, single buffered']
    #allocation3 [shape = 's32[1]{0}', space=sflag, size = 0x4, scoped, tag = 'scoped memory for ae_decoder_forward.1']
    #allocation4 [shape = 'u8[16384]{0}', space=vmem, size = 0x4000, scoped, tag = 'input window, operand 1, single buffered']
    #allocation5 [shape = 's32[1]{0}', space=sflag, size = 0x4, scoped, tag = 'scoped memory for ae_decoder_forward.1']
    #allocation6 [shape = 'u8[32768]{0}', space=vmem, size = 0x8000, scoped, tag = 'input window, operand 3, single buffered']
    %10 = vsyncpa [#allocation3], 0
    %11 = vsyncpa [#allocation5], 0
    // Predicated region
    $region2: #{ae_decoder_forward.1} parent=1 // pred_check
      _
    $region3: #{ae_decoder_forward.1} parent=1 // pred_check_branch
      %13 = sbr.rel (0) target = $region5
    $region4: #{ae_decoder_forward.1} parent=1 // pred_region
      %s15 = ssub.s32 128, 128
      %16 = vsyncadd [#allocation3], %s15
      %s18 = sshll.u32 [#allocation2], 4
      %s19 = int_to_ptr.vmem [resolvable:$true] %s18
      %21 = dma.hbm_to_vmem [thread:$0]  %s0, 128, %s19, [#allocation3]
    $region5: #{ae_decoder_forward.1} parent=1 // pred_fallthru
      _
    // Predicated region
    $region6: #{ae_decoder_forward.1} parent=1 // pred_check
      _
    $region7: #{ae_decoder_forward.1} parent=1 // pred_check_branch
      %23 = sbr.rel (0) target = $region9
    $region8: #{ae_decoder_forward.1} parent=1 // pred_region
      %s25 = ssub.s32 512, 512
      %26 = vsyncadd [#allocation5], %s25
      %s27 = sshll.u32 [#allocation4], 4
      %s28 = int_to_ptr.vmem [resolvable:$true] %s27
      %33 = dma.hbm_to_vmem [thread:$0]  %s1, 512, %s28, [#allocation5], 128, 128, 8
    $region9: #{ae_decoder_forward.1} parent=1 // pred_fallthru
      _
    // Predicated region
    $region10: #{ae_decoder_forward.1} parent=1 // pred_check
      _
    $region11: #{ae_decoder_forward.1} parent=1 // pred_check_branch
      %35 = sbr.rel (0) target = $region13
    $region12: #{ae_decoder_forward.1} parent=1 // pred_region
      _
    $region13: #{ae_decoder_forward.1} parent=1 // pred_fallthru
      _
    // Predicated region
    $region14: #{ae_decoder_forward.1} parent=1 // pred_check
      _
    $region15: #{ae_decoder_forward.1} parent=1 // pred_check_branch
      %37 = sbr.rel (0) target = $region17
    $region16: #{ae_decoder_forward.1} parent=1 // pred_region
      %s39 = ssub.s32 1024, 1024
      %40 = vsyncadd [#allocation5], %s39
      %s41 = sshll.u32 [#allocation6], 4
      %s42 = int_to_ptr.vmem [resolvable:$true] %s41
      %47 = dma.hbm_to_vmem [thread:$0]  %s3, 1024, %s42, [#allocation5], 128, 128, 8
    $region17: #{ae_decoder_forward.1} parent=1 // pred_fallthru
      _
    // Predicated region
    $region18: #{ae_decoder_forward.1} parent=1 // pred_check
      _
    $region19: #{ae_decoder_forward.1} parent=1 // pred_check_branch
      %49 = sbr.rel (0) target = $region21
    $region20: #{ae_decoder_forward.1} parent=1 // pred_region
      _
    $region21: #{ae_decoder_forward.1} parent=1 // pred_fallthru
      _
    // Predicated region
    $region22: #{ae_decoder_forward.1} parent=1 // pred_check
      _
    $region23: #{ae_decoder_forward.1} parent=1 // pred_check_branch
      %51 = sbr.rel (0) target = $region25
    $region24: #{ae_decoder_forward.1} parent=1 // pred_region
      %52 = dma.done [#allocation3], 128
    $region25: #{ae_decoder_forward.1} parent=1 // pred_fallthru
      _
    // Predicated region
    $region26: #{ae_decoder_forward.1} parent=1 // pred_check
      _
    $region27: #{ae_decoder_forward.1} parent=1 // pred_check_branch
      %54 = sbr.rel (0) target = $region29
    $region28: #{ae_decoder_forward.1} parent=1 // pred_region
      %55 = dma.done [#allocation5], 512
    $region29: #{ae_decoder_forward.1} parent=1 // pred_fallthru
      _
    // Predicated region
    $region30: #{ae_decoder_forward.1} parent=1 // pred_check
      _
    $region31: #{ae_decoder_forward.1} parent=1 // pred_check_branch
      %57 = sbr.rel (0) target = $region33
    $region32: #{ae_decoder_forward.1} parent=1 // pred_region
      %58 = dma.done [#allocation5], 1024
    $region33: #{ae_decoder_forward.1} parent=1 // pred_fallthru
      _
    %v59 = vld [vmem:[#allocation2] sm:$0xff]
    %v60 = vld [vmem:[#allocation4] sm:$0xff]
    %v61 = vld [vmem:[#allocation4 + $0x8] sm:$0xff]
    %v62 = vld [vmem:[#allocation4 + $0x10] sm:$0xff]
    %v63 = vld [vmem:[#allocation4 + $0x18] sm:$0xff]
    %v64 = vld [vmem:[%s2] sm:$0x1]
    %v66 = vlaneseq
    %v67 = vshrl.u32 %v66, 7
    %v68 = vsub.s32 0, %v67
    %v69 = vrot.slane %v64, %v68
    %vm71 = vcmask 261120
    %v73 = vsel %vm71, %v59, 0
    %75 = vmatprep.subr.mxu0 0.0
    %76 = vmatpush1.msra.mxu0 %v60
    %77 = vmatprep.subr.mxu0 0.0
    %78 = vmatpush1.msra.mxu0 %v61
    %79 = vmatprep.subr.mxu0 0.0
    %80 = vmatpush1.msra.mxu0 %v62
    %81 = vmatprep.subr.mxu0 0.0
    %82 = vmatpush1.msra.mxu0 %v63
    %83 = vmatprep.subr.mxu0 0.0
    %84 = vmatpush1.msra.mxu0 0.0
    %85 = vmatprep.subr.mxu0 0.0
    %86 = vmatpush1.msra.mxu0 0.0
    %87 = vmatprep.subr.mxu0 0.0
    %88 = vmatpush1.msra.mxu0 0.0
    %89 = vmatprep.subr.mxu0 0.0
    %90 = vmatpush1.msra.mxu0 0.0
    %91 = vmatprep.subr.mxu0 0.0
    %92 = vmatpush1.msra.mxu0 0.0
    %93 = vmatprep.subr.mxu0 0.0
    %94 = vmatpush1.msra.mxu0 0.0
    %95 = vmatprep.subr.mxu0 0.0
    %96 = vmatpush1.msra.mxu0 0.0
    %97 = vmatprep.subr.mxu0 0.0
    %98 = vmatpush1.msra.mxu0 0.0
    %99 = vmatprep.subr.mxu0 0.0
    %100 = vmatpush1.msra.mxu0 0.0
    %101 = vmatprep.subr.mxu0 0.0
    %102 = vmatpush1.msra.mxu0 0.0
    %103 = vmatprep.subr.mxu0 0.0
    %104 = vmatpush1.msra.mxu0 0.0
    %105 = vmatprep.subr.mxu0 0.0
    %106 = vmatpush1.msra.mxu0 0.0
    %107 = vmatprep.subr.mxu0 0.0
    %108 = vmatpush1.msra.mxu0 0.0
    %109 = vmatprep.subr.mxu0 0.0
    %110 = vmatpush1.msra.mxu0 0.0
    %111 = vmatprep.subr.mxu0 0.0
    %112 = vmatpush1.msra.mxu0 0.0
    %113 = vmatprep.subr.mxu0 0.0
    %114 = vmatpush1.msra.mxu0 0.0
    %115 = vmatprep.subr.mxu0 0.0
    %116 = vmatpush1.msra.mxu0 0.0
    %117 = vmatprep.subr.mxu0 0.0
    %118 = vmatpush1.msra.mxu0 0.0
    %119 = vmatprep.subr.mxu0 0.0
    %120 = vmatpush1.msra.mxu0 0.0
    %121 = vmatprep.subr.mxu0 0.0
    %122 = vmatpush1.msra.mxu0 0.0
    %123 = vmatprep.subr.mxu0 0.0
    %124 = vmatpush1.msra.mxu0 0.0
    %125 = vmatprep.subr.mxu0 0.0
    %126 = vmatpush1.msra.mxu0 0.0
    %127 = vmatprep.subr.mxu0 0.0
    %128 = vmatpush1.msra.mxu0 0.0
    %129 = vmatprep.subr.mxu0 0.0
    %130 = vmatpush1.msra.mxu0 0.0
    %131 = vmatprep.subr.mxu0 0.0
    %132 = vmatpush1.msra.mxu0 0.0
    %133 = vmatprep.subr.mxu0 0.0
    %134 = vmatpush1.msra.mxu0 0.0
    %135 = vmatprep.subr.mxu0 0.0
    %136 = vmatpush1.msra.mxu0 0.0
    %137 = vmatprep.subr.mxu0 0.0
    %138 = vmatpush1.msra.mxu0 0.0
    %139 = vmatprep.mubr.f32.mxu0 0.0
    %140 = vmatmul.mubr.f32.gmra.mrb[0].mxu0 %v73
    %v141 = vpop.f32.mrb[0].mxu0
    %v142 = vadd.f32 %v69, %v141
    %v143 = vpop.f32.mrb[0].mxu0
    %144 = vdwg.mxu0
    %v145 = vmax.f32 %v142, 0.0
    %v146 = vld [vmem:[#allocation6] sm:$0xff]
    %v147 = vld [vmem:[#allocation6 + $0x8] sm:$0xff]
    %v148 = vld [vmem:[#allocation6 + $0x10] sm:$0xff]
    %v149 = vld [vmem:[#allocation6 + $0x18] sm:$0xff]
    %v150 = vld [vmem:[#allocation6 + $0x20] sm:$0xff]
    %v151 = vld [vmem:[#allocation6 + $0x28] sm:$0xff]
    %v152 = vld [vmem:[#allocation6 + $0x30] sm:$0xff]
    %v153 = vld [vmem:[#allocation6 + $0x38] sm:$0xff]
    %v154 = vld [vmem:[%s4] sm:$0x1]
    %v156 = vlaneseq
    %v157 = vshrl.u32 %v156, 7
    %v158 = vsub.s32 0, %v157
    %v159 = vrot.slane %v154, %v158
    %vm161 = vcmask 523264
    %v163 = vsel %vm161, %v145, 0
    %165 = vmatprep.subr.mxu0 0.0
    %166 = vmatpush1.msra.mxu0 %v146
    %167 = vmatprep.subr.mxu0 0.0
    %168 = vmatpush1.msra.mxu0 %v147
    %169 = vmatprep.subr.mxu0 0.0
    %170 = vmatpush1.msra.mxu0 %v148
    %171 = vmatprep.subr.mxu0 0.0
    %172 = vmatpush1.msra.mxu0 %v149
    %173 = vmatprep.subr.mxu0 0.0
    %174 = vmatpush1.msra.mxu0 %v150
    %175 = vmatprep.subr.mxu0 0.0
    %176 = vmatpush1.msra.mxu0 %v151
    %177 = vmatprep.subr.mxu0 0.0
    %178 = vmatpush1.msra.mxu0 %v152
    %179 = vmatprep.subr.mxu0 0.0
    %180 = vmatpush1.msra.mxu0 %v153
    %181 = vmatprep.subr.mxu0 0.0
    %182 = vmatpush1.msra.mxu0 0.0
    %183 = vmatprep.subr.mxu0 0.0
    %184 = vmatpush1.msra.mxu0 0.0
    %185 = vmatprep.subr.mxu0 0.0
    %186 = vmatpush1.msra.mxu0 0.0
    %187 = vmatprep.subr.mxu0 0.0
    %188 = vmatpush1.msra.mxu0 0.0
    %189 = vmatprep.subr.mxu0 0.0
    %190 = vmatpush1.msra.mxu0 0.0
    %191 = vmatprep.subr.mxu0 0.0
    %192 = vmatpush1.msra.mxu0 0.0
    %193 = vmatprep.subr.mxu0 0.0
    %194 = vmatpush1.msra.mxu0 0.0
    %195 = vmatprep.subr.mxu0 0.0
    %196 = vmatpush1.msra.mxu0 0.0
    %197 = vmatprep.subr.mxu0 0.0
    %198 = vmatpush1.msra.mxu0 0.0
    %199 = vmatprep.subr.mxu0 0.0
    %200 = vmatpush1.msra.mxu0 0.0
    %201 = vmatprep.subr.mxu0 0.0
    %202 = vmatpush1.msra.mxu0 0.0
    %203 = vmatprep.subr.mxu0 0.0
    %204 = vmatpush1.msra.mxu0 0.0
    %205 = vmatprep.subr.mxu0 0.0
    %206 = vmatpush1.msra.mxu0 0.0
    %207 = vmatprep.subr.mxu0 0.0
    %208 = vmatpush1.msra.mxu0 0.0
    %209 = vmatprep.subr.mxu0 0.0
    %210 = vmatpush1.msra.mxu0 0.0
    %211 = vmatprep.subr.mxu0 0.0
    %212 = vmatpush1.msra.mxu0 0.0
    %213 = vmatprep.subr.mxu0 0.0
    %214 = vmatpush1.msra.mxu0 0.0
    %215 = vmatprep.subr.mxu0 0.0
    %216 = vmatpush1.msra.mxu0 0.0
    %217 = vmatprep.subr.mxu0 0.0
    %218 = vmatpush1.msra.mxu0 0.0
    %219 = vmatprep.subr.mxu0 0.0
    %220 = vmatpush1.msra.mxu0 0.0
    %221 = vmatprep.subr.mxu0 0.0
    %222 = vmatpush1.msra.mxu0 0.0
    %223 = vmatprep.subr.mxu0 0.0
    %224 = vmatpush1.msra.mxu0 0.0
    %225 = vmatprep.subr.mxu0 0.0
    %226 = vmatpush1.msra.mxu0 0.0
    %227 = vmatprep.subr.mxu0 0.0
    %228 = vmatpush1.msra.mxu0 0.0
    %229 = vmatprep.mubr.f32.mxu0 0.0
    %230 = vmatmul.mubr.f32.gmra.mrb[0].mxu0 %v163
    %v231 = vpop.f32.mrb[0].mxu0
    %v232 = vadd.f32 %v159, %v231
    %v233 = vpop.f32.mrb[0].mxu0
    %234 = vdwg.mxu0
    %v235 = vxor.u32 %v232, 2147483648
    %v236 = vmul.f32 %v235, 1.442695
    %v237 = vpow.pop %v236
    %v238 = vadd.f32 %v237, 1.0
    %v239 = vrcp.pop %v238
    %v240 = vmul.f32 1.0, %v239
    %241 = vst [vmem:[%s5] sm:$0xff] %v240
    // Predicated region
    $region34: #{ae_decoder_forward.1} parent=1 // pred_check
      _
    $region35: #{ae_decoder_forward.1} parent=1 // pred_check_branch
      %243 = sbr.rel (0) target = $region37
    $region36: #{ae_decoder_forward.1} parent=1 // pred_region
      _
    $region37: #{ae_decoder_forward.1} parent=1 // pred_fallthru
      _
    // Predicated region
    $region38: #{ae_decoder_forward.1} parent=1 // pred_check
      _
    $region39: #{ae_decoder_forward.1} parent=1 // pred_check_branch
      %245 = sbr.rel (0) target = $region41
    $region40: #{ae_decoder_forward.1} parent=1 // pred_region
      _
    $region41: #{ae_decoder_forward.1} parent=1 // pred_fallthru
      _
    %246 = vsyncpa [#allocation3], 1
    %247 = vsyncpa [#allocation5], 1

</llo_original>
